<compile_context>
chip_gen: v7x
topology: tpu7x:2x2x1
jax: 0.10.0
libtpu: 0.0.40
codegen_flags: <defaults>
</compile_context>

<pallas_src>
import jax
import jax.numpy as jnp
from jax.experimental import pallas as pl
from jax.experimental.pallas import tpu as pltpu


def _mlp_kernel(x_ref, w1_ref, b1_ref, w2_ref, b2_ref, o_ref):
    # fc1 on the MXU: packed (TBr, P*F) @ (P*F, P*H), bf16 inputs, f32 accumulation.
    h = jnp.dot(x_ref[...], w1_ref[...], preferred_element_type=jnp.float32)
    # Bias + ReLU on the VPU in f32.
    h = jnp.maximum(h + b1_ref[...], 0.0)
    # fc2 on the MXU via a block-diagonal (P*H, P) weight: the result stays sublane-major
    # (TBr, P) -- no sublane->lane relayout, no grouped lane reduce.
    y = jnp.dot(h, w2_ref[...], preferred_element_type=jnp.float32)
    o_ref[...] = y + b2_ref[0, 0]


def _round_up(x, m):
    return ((x + m - 1) // m) * m


def _packing(num_features):
    """Pad F up to a power-of-two divisor of 128 and return (F_pad, P = 128 // F_pad)."""
    if num_features >= 128:
        return num_features, 1
    f_pad = 1
    while f_pad < num_features:
        f_pad *= 2
    return f_pad, 128 // f_pad


def ranking_model_forward(x, w1_t, b1, w2_row, b2, *, block_b=8192,
                          compute_dtype=jnp.bfloat16):
    """relu(x @ W1 + b1) @ W2.T + b2  (== torch RankingModel.forward).

    x:      (B, F) float32
    w1_t:   (F, H)  -- torch fc1.weight transposed
    b1:     (1, H)
    w2_row: (1, H)  -- torch fc2.weight (already a row)
    b2:     (1, 1)
    Returns (B, 1) float32.
    """
    B, F = x.shape
    H = w1_t.shape[1]

    # --- Packing: put P samples on each 128-lane row --------------------------------
    F_pad, P = _packing(F)
    if F_pad != F:
        x = jnp.pad(x, ((0, 0), (0, F_pad - F)))
        w1_t = jnp.pad(w1_t, ((0, F_pad - F), (0, 0)))

    # --- Batch tiling (TB in samples; packed tile is (TBr, P*F_pad)) -----------------
    row_align = 8 * P                       # packed sublane rows must be a multiple of 8
    num_tiles = pl.cdiv(B, block_b)
    if B >= 2 * row_align:
        num_tiles = max(num_tiles, 2)       # v7x: give both TensorCores a tile
    TB = _round_up(pl.cdiv(B, num_tiles), row_align)
    num_tiles = pl.cdiv(B, TB)
    B_pad = num_tiles * TB
    TBr = TB // P                           # packed rows per tile
    if B_pad != B:
        x = jnp.pad(x, ((0, B_pad - B), (0, 0)))
    x_packed = x.reshape(B_pad // P, P * F_pad).astype(compute_dtype)

    # --- Weight prep (tiny, done once outside the kernel) ----------------------------
    # Block-diagonal fc1 weight keeps the P packed samples independent; block-diagonal
    # fc2 column stack makes the kernel output (TBr, P) directly.
    eye = jnp.eye(P, dtype=jnp.float32)
    w1_block = jnp.kron(eye, w1_t.astype(jnp.float32)).astype(compute_dtype)   # (P*F, P*H)
    b1_tiled = jnp.tile(b1.reshape(1, H).astype(jnp.float32), (1, P))          # (1, P*H)
    w2_block = jnp.kron(eye, w2_row.reshape(H, 1).astype(jnp.float32))         # (P*H, P)
    b2 = b2.reshape(1, 1).astype(jnp.float32)

    # --- VMEM budget (real padded footprints, per grid step) -------------------------
    #   x tile   : TBr x 128 lanes x itemsize, double-buffered
    #   h (f32)  : TBr x (P*H) x 4 B, compiler-managed intermediate (~2 copies)
    #   out tile : (TBr, P) f32 lane-pads to 128 lanes -> TBr x 512 B, x2 buffers
    #   weights  : < 0.3 MiB, grid-invariant (single resident copy)
    # Default block_b=8192 -> ~5-7 MiB: fits v5e's 16 MiB default scoped limit; larger
    # tiles get an explicit limit (clamped to 48 MiB, safe on v7x's 64 MiB physical VMEM).
    itemsize = jnp.dtype(compute_dtype).itemsize
    vmem_est = TBr * (2 * 128 * itemsize + 2 * P * H * 4 + 2 * 512) + (2 << 20)
    vmem_limit = int(min(max(vmem_est, 16 << 20), 48 << 20))

    cost = pl.CostEstimate(
        flops=2 * B_pad * F_pad * H + 2 * B_pad * H,
        transcendentals=0,
        bytes_accessed=(x_packed.size * itemsize + B_pad * 4
                        + w1_block.size * itemsize
                        + (b1_tiled.size + w2_block.size + 1) * 4),
    )

    out = pl.pallas_call(
        _mlp_kernel,
        out_shape=jax.ShapeDtypeStruct((B_pad // P, P), jnp.float32),
        grid=(num_tiles,),
        in_specs=[
            # x: one packed batch tile per grid step, double-buffered HBM->VMEM.
            # (Bump to pipeline_mode=pl.Buffered(3) only if profiles show exposed DMA.)
            pl.BlockSpec((TBr, P * F_pad), lambda i: (i, 0)),
            # Weights / biases: same block every step -> loaded once, stay VMEM-resident.
            pl.BlockSpec((P * F_pad, P * H), lambda i: (0, 0)),
            pl.BlockSpec((1, P * H), lambda i: (0, 0)),
            pl.BlockSpec((P * H, P), lambda i: (0, 0)),
            # b2 scalar lives in SMEM: no padded VMEM tile, no per-step DMA.
            pl.BlockSpec(memory_space=pltpu.MemorySpace.SMEM),
        ],
        out_specs=pl.BlockSpec((TBr, P), lambda i: (i, 0)),
        compiler_params=pltpu.CompilerParams(
            dimension_semantics=("parallel",),   # independent batch tiles -> megacore on v7x
            vmem_limit_bytes=vmem_limit,
        ),
        cost_estimate=cost,
    )(x_packed, w1_block, b1_tiled, w2_block, b2)

    # (B_pad/P, P) row-major == packed sample order, so a flat reshape unpacks it.
    return out.reshape(B_pad, 1)[:B]


def init_params(key, input_size, hidden_size):
    """Deterministic PyTorch-style (uniform +/- 1/sqrt(fan_in)) init."""
    k1, k2, k3, k4 = jax.random.split(key, 4)
    bound1 = 1.0 / (input_size ** 0.5)
    bound2 = 1.0 / (hidden_size ** 0.5)
    # Stored pre-transposed relative to torch's nn.Linear weight layout.
    w1_t = jax.random.uniform(k1, (input_size, hidden_size), jnp.float32, -bound1, bound1)
    b1 = jax.random.uniform(k2, (1, hidden_size), jnp.float32, -bound1, bound1)
    w2_row = jax.random.uniform(k3, (1, hidden_size), jnp.float32, -bound2, bound2)
    b2 = jax.random.uniform(k4, (1, 1), jnp.float32, -bound2, bound2)
    return w1_t, b1, w2_row, b2


if __name__ == "__main__":
    batch = 8
    input_size = 32    # number of features after pd.get_dummies (small demo value)
    hidden_size = 64

    key = jax.random.PRNGKey(0)
    kx, kp = jax.random.split(key)
    x = jax.random.normal(kx, (batch, input_size), dtype=jnp.float32)
    w1_t, b1, w2_row, b2 = init_params(kp, input_size, hidden_size)

    out = ranking_model_forward(x, w1_t, b1, w2_row, b2)
    out = jax.block_until_ready(out)

    # Pure-JAX reference with the same bf16 cast of the fc1 operands (f32 elsewhere);
    # fc2 reference done elementwise to avoid XLA matmul-precision ambiguity.
    xb = x.astype(jnp.bfloat16).astype(jnp.float32)
    w1b = w1_t.astype(jnp.bfloat16).astype(jnp.float32)
    ref_h = jnp.maximum(
        jax.lax.dot(xb, w1b, precision=jax.lax.Precision.HIGHEST) + b1, 0.0)
    ref = (ref_h * w2_row).sum(axis=1, keepdims=True) + b2

    assert out.shape == (batch, 1)
    assert jnp.allclose(out, ref, atol=2e-3, rtol=2e-3), float(jnp.max(jnp.abs(out - ref)))

    print("KERNEL_OK")
</pallas_src>

<mosaic_0001>
module attributes {stable_mosaic.version = 11 : i64} {
  func.func @_mlp_kernel(%arg0: i32, %arg1: memref<8x128xbf16, #tpu.memory_space<vmem>>, %arg2: memref<128x256xbf16, #tpu.memory_space<vmem>>, %arg3: memref<1x256xf32, #tpu.memory_space<vmem>>, %arg4: memref<256x4xf32, #tpu.memory_space<vmem>>, %arg5: memref<1x1xf32, #tpu.memory_space<smem>>, %arg6: memref<8x4xf32, #tpu.memory_space<vmem>>) attributes {dimension_semantics = [#tpu.dimension_semantics<parallel>], iteration_bounds = array<i64: 1>, scalar_prefetch = 0 : i64, scratch_operands = 0 : i64, tpu.core_type = #tpu.core_type<tc>, window_params = [{transform_indices = @transform_0, window_bounds = array<i64: 8, 128>}, {pipeline_mode = #tpu.pipeline_mode<synchronous>, transform_indices = @transform_1, window_bounds = array<i64: 128, 256>}, {pipeline_mode = #tpu.pipeline_mode<synchronous>, transform_indices = @transform_2, window_bounds = array<i64: 1, 256>}, {pipeline_mode = #tpu.pipeline_mode<synchronous>, transform_indices = @transform_3, window_bounds = array<i64: 256, 4>}, {transform_indices = @transform_4, window_bounds = array<i64: 1, 1>}, {transform_indices = @transform_5, window_bounds = array<i64: 8, 4>}]} {
    %c0 = arith.constant 0 : index
    %c0_0 = arith.constant 0 : index
    %0 = vector.load %arg1[%c0, %c0_0] : memref<8x128xbf16, #tpu.memory_space<vmem>>, vector<8x128xbf16>
    %c0_1 = arith.constant 0 : index
    %c0_2 = arith.constant 0 : index
    %1 = vector.load %arg2[%c0_1, %c0_2] : memref<128x256xbf16, #tpu.memory_space<vmem>>, vector<128x256xbf16>
    %cst = arith.constant dense<0.000000e+00> : vector<8x256xf32>
    %2 = tpu.matmul %0, %1, %cst {dimension_numbers = #tpu.dot_dimension_numbers<[1], [0], [0], [1], [0, 0, 1, 1], [], []>} : vector<8x128xbf16>, vector<128x256xbf16>, vector<8x256xf32> -> vector<8x256xf32>
    %c0_3 = arith.constant 0 : index
    %c0_4 = arith.constant 0 : index
    %3 = vector.load %arg3[%c0_3, %c0_4] : memref<1x256xf32, #tpu.memory_space<vmem>>, vector<1x256xf32>
    %4 = vector.broadcast %3 : vector<1x256xf32> to vector<8x256xf32>
    %5 = arith.addf %2, %4 : vector<8x256xf32>
    %cst_5 = arith.constant 0.000000e+00 : f32
    %6 = vector.broadcast %cst_5 : f32 to vector<8x256xf32>
    %7 = arith.maximumf %5, %6 : vector<8x256xf32>
    %c0_6 = arith.constant 0 : index
    %c0_7 = arith.constant 0 : index
    %8 = vector.load %arg4[%c0_6, %c0_7] : memref<256x4xf32, #tpu.memory_space<vmem>>, vector<256x4xf32>
    %cst_8 = arith.constant dense<0.000000e+00> : vector<8x4xf32>
    %9 = tpu.matmul %7, %8, %cst_8 {dimension_numbers = #tpu.dot_dimension_numbers<[1], [0], [0], [1], [0, 0, 1, 1], [], []>} : vector<8x256xf32>, vector<256x4xf32>, vector<8x4xf32> -> vector<8x4xf32>
    %c0_9 = arith.constant 0 : index
    %c0_10 = arith.constant 0 : index
    %10 = memref.load %arg5[%c0_9, %c0_10] : memref<1x1xf32, #tpu.memory_space<smem>>
    %11 = vector.broadcast %10 : f32 to vector<8x4xf32>
    %12 = arith.addf %9, %11 : vector<8x4xf32>
    %c0_11 = arith.constant 0 : index
    %c0_12 = arith.constant 0 : index
    %13 = vector.load %arg6[%c0_11, %c0_12] : memref<8x4xf32, #tpu.memory_space<vmem>>, vector<8x4xf32>
    tpu.vector_store %arg6[%c0_11, %c0_12], %12 {strides = array<i32>} : memref<8x4xf32, #tpu.memory_space<vmem>>, vector<8x4xf32>,
    return
  }
  func.func @transform_0(%arg0: i32) -> (i32, i32) {
    %c0_i32 = arith.constant 0 : i32
    %c0_i32_0 = arith.constant 0 : i32
    return %arg0, %c0_i32 : i32, i32
  }
  func.func @transform_1(%arg0: i32) -> (i32, i32) {
    %c0_i32 = arith.constant 0 : i32
    %c0_i32_0 = arith.constant 0 : i32
    %c0_i32_1 = arith.constant 0 : i32
    return %c0_i32, %c0_i32_0 : i32, i32
  }
  func.func @transform_2(%arg0: i32) -> (i32, i32) {
    %c0_i32 = arith.constant 0 : i32
    %c0_i32_0 = arith.constant 0 : i32
    %c0_i32_1 = arith.constant 0 : i32
    return %c0_i32, %c0_i32_0 : i32, i32
  }
  func.func @transform_3(%arg0: i32) -> (i32, i32) {
    %c0_i32 = arith.constant 0 : i32
    %c0_i32_0 = arith.constant 0 : i32
    %c0_i32_1 = arith.constant 0 : i32
    return %c0_i32, %c0_i32_0 : i32, i32
  }
  func.func @transform_4(%arg0: i32) -> (i32, i32) {
    %c0_i32 = arith.constant 0 : i32
    %c0_i32_0 = arith.constant 0 : i32
    %c0_i32_1 = arith.constant 0 : i32
    return %c0_i32, %c0_i32_0 : i32, i32
  }
  func.func @transform_5(%arg0: i32) -> (i32, i32) {
    %c0_i32 = arith.constant 0 : i32
    %c0_i32_0 = arith.constant 0 : i32
    return %arg0, %c0_i32 : i32, i32
  }
}

</mosaic_0001>

<llo_original>
// kernel: tpu_custom_call.1
$region0: #{tpu_custom_call.1}
  #allocation0 [shape = 'u32[]', space=smem, size = 0x4, offset = 0x4, fixed_abs, tag = 'smem constant byte address 0x4 - core index']
  #allocation1 [shape = 'u32[144,128]{1,0:T(1,128)}', space=vmem, size = 0x12000, scoped, tag = 'internal scratch']
  #allocation2 [shape = 'f32[1,1]{1,0:T(1,128)S(6)}', space=smem, size = 0x200, scoped, tag = 'scoped memory for tpu_custom_call.1']
  %s0 = inlined_call_operand.vmem [shape: bf16[8,128], index: 0, kind: input, shape index: {}]
  %s1 = inlined_call_operand.vmem [shape: bf16[128,256], index: 1, kind: input, shape index: {}]
  %s2 = inlined_call_operand.vmem [shape: f32[1,256], index: 2, kind: input, shape index: {}]
  %s3 = inlined_call_operand.vmem [shape: f32[256,4], index: 3, kind: input, shape index: {}]
  %s4 = inlined_call_operand.<no memory space> [shape: f32[1,1], index: 4, kind: input, shape index: {}]
  %s5 = inlined_call_operand.vmem [shape: f32[8,4], index: 5, kind: output, shape index: {}]
  %s6 = sld [smem:[#allocation0]]
  $region30: #{tpu_custom_call.1} parent=0
    _
  %s8 = ssub.s32 1, %s6
  %s9 = scalar_select 0, %s8, %s6
  %10 = sst [smem:[#allocation2]] %s4
  // Predicated region
  $region2: #{tpu_custom_call.1} parent=0 // pred_check
    _
  $region3: #{tpu_custom_call.1} parent=0 // pred_check_branch
    %12 = sbr.rel (0) target = $region5
  $region4: #{tpu_custom_call.1} parent=0 // pred_region
    _
  $region5: #{tpu_custom_call.1} parent=0 // pred_fallthru
    _
  // Predicated region
  $region6: #{tpu_custom_call.1} parent=0 // pred_check
    _
  $region7: #{tpu_custom_call.1} parent=0 // pred_check_branch
    %14 = sbr.rel (0) target = $region9
  $region8: #{tpu_custom_call.1} parent=0 // pred_region
    _
  $region9: #{tpu_custom_call.1} parent=0 // pred_fallthru
    _
  // Predicated region
  $region10: #{tpu_custom_call.1} parent=0 // pred_check
    _
  $region11: #{tpu_custom_call.1} parent=0 // pred_check_branch
    %16 = sbr.rel (0) target = $region13
  $region12: #{tpu_custom_call.1} parent=0 // pred_region
    _
  $region13: #{tpu_custom_call.1} parent=0 // pred_fallthru
    _
  // Predicated region
  $region14: #{tpu_custom_call.1} parent=0 // pred_check
    _
  $region15: #{tpu_custom_call.1} parent=0 // pred_check_branch
    %18 = sbr.rel (0) target = $region17
  $region16: #{tpu_custom_call.1} parent=0 // pred_region
    _
  $region17: #{tpu_custom_call.1} parent=0 // pred_fallthru
    _
  // Predicated region
  $region18: #{tpu_custom_call.1} parent=0 // pred_check
    _
  $region19: #{tpu_custom_call.1} parent=0 // pred_check_branch
    %20 = sbr.rel (0) target = $region21
  $region20: #{tpu_custom_call.1} parent=0 // pred_region
    _
  $region21: #{tpu_custom_call.1} parent=0 // pred_fallthru
    _
  %v22 = vld [vmem:[%s0] sm:$0xf]
  %v23 = vld [vmem:[%s1] sm:$0xff]
  %v24 = vld [vmem:[%s1 + $0x8] sm:$0xff]
  %v25 = vld [vmem:[%s1 + $0x10] sm:$0xff]
  %v26 = vld [vmem:[%s1 + $0x18] sm:$0xff]
  %v27 = vld [vmem:[%s1 + $0x20] sm:$0xff]
  %v28 = vld [vmem:[%s1 + $0x28] sm:$0xff]
  %v29 = vld [vmem:[%s1 + $0x30] sm:$0xff]
  %v30 = vld [vmem:[%s1 + $0x38] sm:$0xff]
  %v31 = vld [vmem:[%s1 + $0x40] sm:$0xff]
  %v32 = vld [vmem:[%s1 + $0x48] sm:$0xff]
  %v33 = vld [vmem:[%s1 + $0x50] sm:$0xff]
  %v34 = vld [vmem:[%s1 + $0x58] sm:$0xff]
  %v35 = vld [vmem:[%s1 + $0x60] sm:$0xff]
  %v36 = vld [vmem:[%s1 + $0x68] sm:$0xff]
  %v37 = vld [vmem:[%s1 + $0x70] sm:$0xff]
  %v38 = vld [vmem:[%s1 + $0x78] sm:$0xff]
  %v39 = vld [vmem:[%s2] sm:$0x3]
  %v41 = vlaneseq
  %v42 = vshrl.u32 %v41, 7
  %v43 = vsub.s32 0, %v42
  %v44 = vrot.slane %v39, %v43
  %v45 = vlaneseq
  %v46 = vshrl.u32 %v45, 7
  %v47 = vsub.s32 1, %v46
  %v48 = vrot.slane %v39, %v47
  %v67 = vunpack.c.l.b16 %v23
  %v68 = vunpack.c.h.b16 %v23
  %v69 = vunpack.c.l.b16 %v24
  %v70 = vunpack.c.h.b16 %v24
  %v71 = vunpack.c.l.b16 %v25
  %v72 = vunpack.c.h.b16 %v25
  %v73 = vunpack.c.l.b16 %v26
  %v74 = vunpack.c.h.b16 %v26
  %v75 = vunpack.c.l.b16 %v27
  %v76 = vunpack.c.h.b16 %v27
  %v77 = vunpack.c.l.b16 %v28
  %v78 = vunpack.c.h.b16 %v28
  %v79 = vunpack.c.l.b16 %v29
  %v80 = vunpack.c.h.b16 %v29
  %v81 = vunpack.c.l.b16 %v30
  %v82 = vunpack.c.h.b16 %v30
  %v83 = vunpack.c.l.b16 %v31
  %v84 = vunpack.c.h.b16 %v31
  %v85 = vunpack.c.l.b16 %v32
  %v86 = vunpack.c.h.b16 %v32
  %v87 = vunpack.c.l.b16 %v33
  %v88 = vunpack.c.h.b16 %v33
  %v89 = vunpack.c.l.b16 %v34
  %v90 = vunpack.c.h.b16 %v34
  %v91 = vunpack.c.l.b16 %v35
  %v92 = vunpack.c.h.b16 %v35
  %v93 = vunpack.c.l.b16 %v36
  %v94 = vunpack.c.h.b16 %v36
  %v95 = vunpack.c.l.b16 %v37
  %v96 = vunpack.c.h.b16 %v37
  %v97 = vunpack.c.l.b16 %v38
  %v98 = vunpack.c.h.b16 %v38
  %v99 = vpack.c.b16 %v69, %v67
  %v100 = vpack.c.b16 %v70, %v68
  %v101 = vpack.c.b16 %v73, %v71
  %v102 = vpack.c.b16 %v74, %v72
  %v103 = vpack.c.b16 %v77, %v75
  %v104 = vpack.c.b16 %v78, %v76
  %v105 = vpack.c.b16 %v81, %v79
  %v106 = vpack.c.b16 %v82, %v80
  %v107 = vpack.c.b16 %v85, %v83
  %v108 = vpack.c.b16 %v86, %v84
  %v109 = vpack.c.b16 %v89, %v87
  %v110 = vpack.c.b16 %v90, %v88
  %v111 = vpack.c.b16 %v93, %v91
  %v112 = vpack.c.b16 %v94, %v92
  %v113 = vpack.c.b16 %v97, %v95
  %v114 = vpack.c.b16 %v98, %v96
  %131 = vmatprep.subr.bf16.mxu0 %v100
  %132 = vmatpush1.bf16.msra.mxu0 %v99
  %133 = vmatprep.subr.bf16.mxu0 %v102
  %134 = vmatpush1.bf16.msra.mxu0 %v101
  %135 = vmatprep.subr.bf16.mxu0 %v104
  %136 = vmatpush1.bf16.msra.mxu0 %v103
  %137 = vmatprep.subr.bf16.mxu0 %v106
  %138 = vmatpush1.bf16.msra.mxu0 %v105
  %139 = vmatprep.subr.bf16.mxu0 %v108
  %140 = vmatpush1.bf16.msra.mxu0 %v107
  %141 = vmatprep.subr.bf16.mxu0 %v110
  %142 = vmatpush1.bf16.msra.mxu0 %v109
  %143 = vmatprep.subr.bf16.mxu0 %v112
  %144 = vmatpush1.bf16.msra.mxu0 %v111
  %145 = vmatprep.subr.bf16.mxu0 %v114
  %146 = vmatpush1.bf16.msra.mxu0 %v113
  %147 = vmatprep.subr.bf16.mxu0 0
  %148 = vmatpush1.bf16.msra.mxu0 0
  %149 = vmatprep.subr.bf16.mxu0 0
  %150 = vmatpush1.bf16.msra.mxu0 0
  %151 = vmatprep.subr.bf16.mxu0 0
  %152 = vmatpush1.bf16.msra.mxu0 0
  %153 = vmatprep.subr.bf16.mxu0 0
  %154 = vmatpush1.bf16.msra.mxu0 0
  %155 = vmatprep.subr.bf16.mxu0 0
  %156 = vmatpush1.bf16.msra.mxu0 0
  %157 = vmatprep.subr.bf16.mxu0 0
  %158 = vmatpush1.bf16.msra.mxu0 0
  %159 = vmatprep.subr.bf16.mxu0 0
  %160 = vmatpush1.bf16.msra.mxu0 0
  %161 = vmatprep.subr.bf16.mxu0 0
  %162 = vmatpush1.bf16.msra.mxu0 0
  %163 = vmatprep.mubr.bf16.mxu0 0
  %164 = vmatmul.mubr.bf16.gmra.mrb[0].mxu0 %v22
  %v165 = vpop.f32.mrb[0].mxu0
  %v166 = vadd.f32 %v44, %v165
  %v167 = vpop.f32.mrb[0].mxu0
  %v168 = vadd.f32 %v48, %v167
  %v169 = vpop.f32.mrb[0].mxu0
  %v170 = vpop.f32.mrb[0].mxu0
  %171 = vdwg.mxu0
  %v172 = vmax.f32 %v166, 0.0
  %v173 = vmax.f32 %v168, 0.0
  %v174 = vld [vmem:[%s3] sm:$0xff]
  %v175 = vld [vmem:[%s3 + $0x8] sm:$0xff]
  %v176 = vld [vmem:[%s3 + $0x10] sm:$0xff]
  %v177 = vld [vmem:[%s3 + $0x18] sm:$0xff]
  %v178 = vld [vmem:[%s3 + $0x20] sm:$0xff]
  %v179 = vld [vmem:[%s3 + $0x28] sm:$0xff]
  %v180 = vld [vmem:[%s3 + $0x30] sm:$0xff]
  %v181 = vld [vmem:[%s3 + $0x38] sm:$0xff]
  %v182 = vld [vmem:[%s3 + $0x40] sm:$0xff]
  %v183 = vld [vmem:[%s3 + $0x48] sm:$0xff]
  %v184 = vld [vmem:[%s3 + $0x50] sm:$0xff]
  %v185 = vld [vmem:[%s3 + $0x58] sm:$0xff]
  %v186 = vld [vmem:[%s3 + $0x60] sm:$0xff]
  %v187 = vld [vmem:[%s3 + $0x68] sm:$0xff]
  %v188 = vld [vmem:[%s3 + $0x70] sm:$0xff]
  %v189 = vld [vmem:[%s3 + $0x78] sm:$0xff]
  %v190 = vld [vmem:[%s3 + $0x80] sm:$0xff]
  %v191 = vld [vmem:[%s3 + $0x88] sm:$0xff]
  %v192 = vld [vmem:[%s3 + $0x90] sm:$0xff]
  %v193 = vld [vmem:[%s3 + $0x98] sm:$0xff]
  %v194 = vld [vmem:[%s3 + $0xa0] sm:$0xff]
  %v195 = vld [vmem:[%s3 + $0xa8] sm:$0xff]
  %v196 = vld [vmem:[%s3 + $0xb0] sm:$0xff]
  %v197 = vld [vmem:[%s3 + $0xb8] sm:$0xff]
  %v198 = vld [vmem:[%s3 + $0xc0] sm:$0xff]
  %v199 = vld [vmem:[%s3 + $0xc8] sm:$0xff]
  %v200 = vld [vmem:[%s3 + $0xd0] sm:$0xff]
  %v201 = vld [vmem:[%s3 + $0xd8] sm:$0xff]
  %v202 = vld [vmem:[%s3 + $0xe0] sm:$0xff]
  %v203 = vld [vmem:[%s3 + $0xe8] sm:$0xff]
  %v204 = vld [vmem:[%s3 + $0xf0] sm:$0xff]
  %v205 = vld [vmem:[%s3 + $0xf8] sm:$0xff]
  %s206 = sld [smem:[#allocation2]]
  %v207 = vstv %s206
  %208 = vmatprep.subr.mxu0 0.0
  %209 = vmatpush1.msra.mxu0 %v174
  %210 = vmatprep.subr.mxu0 0.0
  %211 = vmatpush1.msra.mxu0 %v175
  %212 = vmatprep.subr.mxu0 0.0
  %213 = vmatpush1.msra.mxu0 %v176
  %214 = vmatprep.subr.mxu0 0.0
  %215 = vmatpush1.msra.mxu0 %v177
  %216 = vmatprep.subr.mxu0 0.0
  %217 = vmatpush1.msra.mxu0 %v178
  %218 = vmatprep.subr.mxu0 0.0
  %219 = vmatpush1.msra.mxu0 %v179
  %220 = vmatprep.subr.mxu0 0.0
  %221 = vmatpush1.msra.mxu0 %v180
  %222 = vmatprep.subr.mxu0 0.0
  %223 = vmatpush1.msra.mxu0 %v181
  %224 = vmatprep.subr.mxu0 0.0
  %225 = vmatpush1.msra.mxu0 %v182
  %226 = vmatprep.subr.mxu0 0.0
  %227 = vmatpush1.msra.mxu0 %v183
  %228 = vmatprep.subr.mxu0 0.0
  %229 = vmatpush1.msra.mxu0 %v184
  %230 = vmatprep.subr.mxu0 0.0
  %231 = vmatpush1.msra.mxu0 %v185
  %232 = vmatprep.subr.mxu0 0.0
  %233 = vmatpush1.msra.mxu0 %v186
  %234 = vmatprep.subr.mxu0 0.0
  %235 = vmatpush1.msra.mxu0 %v187
  %236 = vmatprep.subr.mxu0 0.0
  %237 = vmatpush1.msra.mxu0 %v188
  %238 = vmatprep.subr.mxu0 0.0
  %239 = vmatpush1.msra.mxu0 %v189
  %240 = vmatprep.subr.mxu0 0.0
  %241 = vmatpush1.msra.mxu0 %v190
  %242 = vmatprep.subr.mxu0 0.0
  %243 = vmatpush1.msra.mxu0 %v191
  %244 = vmatprep.subr.mxu0 0.0
  %245 = vmatpush1.msra.mxu0 %v192
  %246 = vmatprep.subr.mxu0 0.0
  %247 = vmatpush1.msra.mxu0 %v193
  %248 = vmatprep.subr.mxu0 0.0
  %249 = vmatpush1.msra.mxu0 %v194
  %250 = vmatprep.subr.mxu0 0.0
  %251 = vmatpush1.msra.mxu0 %v195
  %252 = vmatprep.subr.mxu0 0.0
  %253 = vmatpush1.msra.mxu0 %v196
  %254 = vmatprep.subr.mxu0 0.0
  %255 = vmatpush1.msra.mxu0 %v197
  %256 = vmatprep.subr.mxu0 0.0
  %257 = vmatpush1.msra.mxu0 %v198
  %258 = vmatprep.subr.mxu0 0.0
  %259 = vmatpush1.msra.mxu0 %v199
  %260 = vmatprep.subr.mxu0 0.0
  %261 = vmatpush1.msra.mxu0 %v200
  %262 = vmatprep.subr.mxu0 0.0
  %263 = vmatpush1.msra.mxu0 %v201
  %264 = vmatprep.subr.mxu0 0.0
  %265 = vmatpush1.msra.mxu0 %v202
  %266 = vmatprep.subr.mxu0 0.0
  %267 = vmatpush1.msra.mxu0 %v203
  %268 = vmatprep.subr.mxu0 0.0
  %269 = vmatpush1.msra.mxu0 %v204
  %270 = vmatprep.subr.mxu0 0.0
  %271 = vmatpush1.msra.mxu0 %v205
  %272 = vmatprep.mubr.f32.mxu0 %v173
  %273 = vmatmul.mubr.f32.gmra.mrb[0].mxu0 %v172
  %v274 = vpop.f32.mrb[0].mxu0
  %v275 = vadd.f32 %v207, %v274
  %v276 = vpop.f32.mrb[0].mxu0
  %277 = vdwg.mxu0
  %vm278 = vcmask 31744
  %279 = vst.msk [vmem:[%s5] sm:$0xff] %vm278, %v275
  // Predicated region
  $region22: #{tpu_custom_call.1} parent=0 // pred_check
    _
  $region23: #{tpu_custom_call.1} parent=0 // pred_check_branch
    %281 = sbr.rel (0) target = $region25
  $region24: #{tpu_custom_call.1} parent=0 // pred_region
    _
  $region25: #{tpu_custom_call.1} parent=0 // pred_fallthru
    _
  // Predicated region
  $region26: #{tpu_custom_call.1} parent=0 // pred_check
    _
  $region27: #{tpu_custom_call.1} parent=0 // pred_check_branch
    %283 = sbr.rel (0) target = $region29
  $region28: #{tpu_custom_call.1} parent=0 // pred_region
    _
  $region29: #{tpu_custom_call.1} parent=0 // pred_fallthru
    _

</llo_original>
